<compile_context>
chip_gen: v7x
topology: tpu7x:2x2x1
jax: 0.10.0
libtpu: 0.0.40
codegen_flags: <defaults>
</compile_context>

<pallas_src>
import functools
import math

import jax
import jax.numpy as jnp
from jax.experimental import pallas as pl
from jax.experimental.pallas import tpu as pltpu


def _round_up(x, m):
    return ((x + m - 1) // m) * m


def _fused_mlp_kernel(x_ref, *refs, n_layers):
    """Whole MLP in one kernel body; intermediates never leave vregs/VMEM.

    Argument order: x_ref, W1, b1, W2, b2, ..., WK, bK, o_ref.
    """
    w_refs = refs[0:2 * n_layers:2]
    b_refs = refs[1:2 * n_layers:2]
    o_ref = refs[2 * n_layers]

    y = x_ref[...]
    for k in range(n_layers):
        y = jnp.dot(y, w_refs[k][...], preferred_element_type=jnp.float32)
        y = y + b_refs[k][...]              # (1, n_out_k) broadcast over batch
        if k < n_layers - 1:
            y = jnp.maximum(y, 0.0)
    o_ref[...] = y.astype(o_ref.dtype)      # single store of the final tile


def _resident_spec(shape):
    """Constant-index (VMEM-resident) spec; single-buffered when supported."""
    try:
        return pl.BlockSpec(shape, lambda i: (0, 0),
                            pipeline_mode=pl.Buffered(1))
    except (TypeError, AttributeError):     # older jax: no pipeline_mode kwarg
        return pl.BlockSpec(shape, lambda i: (0, 0))


def reseau_forward(x, params, K, *, tb_max=4096):
    """Pallas version of Reseau.forward (verbose/return_last_hidden omitted).

    x: (B, ...) -> flattened to (B, n_in) if ndim >= 3.
    params: list of (W: (n_in_k, n_out_k), b: (1, n_out_k)) in f32.
    """
    x = x.astype(jnp.float32)
    if x.ndim >= 3:
        x = x.reshape(x.shape[0], -1)       # mimics x.view(x.size(0), -1)

    B, n_in = x.shape
    n_out = params[-1][0].shape[1]

    # Batch tile: multiple of 8 sublanes, large enough to amortize per-step
    # overhead, capped at ceil(B/2) so big batches always give >= 2 grid steps
    # (keeps both v7x TensorCores fed).  No batch padding: ragged last block.
    TB = min(tb_max, _round_up(max((B + 1) // 2, 1), 8))
    TB = max(TB, 8)
    grid = (pl.cdiv(B, TB),)

    # VMEM budget for the compiler: double-buffered x/out blocks + weights.
    LANE, SUB = 128, 8
    x_blk = TB * _round_up(n_in, LANE) * 4
    o_blk = TB * _round_up(n_out, LANE) * 4
    w_bytes = 0
    for W, b in params:
        w_bytes += _round_up(W.shape[0], SUB) * _round_up(W.shape[1], LANE) * 4
        w_bytes += SUB * _round_up(b.shape[1], LANE) * 4
    vmem_needed = 2 * (x_blk + o_blk) + 2 * w_bytes   # 2x weights: worst case
    vmem_limit = max(32 << 20, min(int(vmem_needed * 1.25) + (2 << 20),
                                   100 << 20))

    operands = [x]
    in_specs = [pl.BlockSpec((TB, n_in), lambda i: (i, 0))]
    for W, b in params:
        operands += [W, b]
        in_specs += [_resident_spec(W.shape), _resident_spec(b.shape)]

    kernel = functools.partial(_fused_mlp_kernel, n_layers=K)
    out = pl.pallas_call(
        kernel,
        out_shape=jax.ShapeDtypeStruct((B, n_out), jnp.float32),
        grid=grid,
        in_specs=in_specs,
        out_specs=pl.BlockSpec((TB, n_out), lambda i: (i, 0)),
        compiler_params=pltpu.CompilerParams(
            dimension_semantics=("parallel",),
            vmem_limit_bytes=vmem_limit),
    )(*operands)
    return out


def init_params(key, n, K):
    """Deterministic params matching nn.Linear default init:
    W, b ~ U(-1/sqrt(fan_in), 1/sqrt(fan_in)).
    Returned W is (in, out); b is (1, out) (pre-shaped for the kernel)."""
    params = []
    for k in range(1, K + 1):
        fan_in, fan_out = n[k - 1], n[k]
        key, kw, kb = jax.random.split(key, 3)
        bound = 1.0 / math.sqrt(fan_in)
        W = jax.random.uniform(kw, (fan_in, fan_out), jnp.float32, -bound, bound)
        b = jax.random.uniform(kb, (1, fan_out), jnp.float32, -bound, bound)
        params.append((W, b))
    return params


def reseau_forward_ref(x, params, K):
    """Pure-JAX reference for correctness check."""
    x = x.astype(jnp.float32)
    if x.ndim >= 3:
        x = x.reshape(x.shape[0], -1)
    for k, (W, b) in enumerate(params):
        x = x @ W + b
        if k < K - 1:
            x = jnp.maximum(x, 0.0)
    return x


if __name__ == "__main__":
    # Architecture: 'MNIST' default -> n = [784, 8, 8, 8, 10], K = 4
    n = [784, 8, 8, 8, 10]
    K = 4

    key = jax.random.PRNGKey(0)
    key_params, key_x1, key_x2 = jax.random.split(key, 3)
    params = init_params(key_params, n, K)

    # Test 1: small "MNIST-like" NCHW batch (2, 1, 28, 28), flattened to 784
    # inside the forward exactly like the PyTorch module does.
    x1 = jax.random.normal(key_x1, (2, 1, 28, 28), dtype=jnp.float32)
    out1 = jax.block_until_ready(reseau_forward(x1, params, K))
    ref1 = reseau_forward_ref(x1, params, K)
    assert out1.shape == (2, n[-1]), f"bad shape {out1.shape}"
    assert jnp.allclose(out1, ref1, atol=1e-5, rtol=1e-5), "mismatch (test 1)"

    # Test 2: 2-D input with a batch that exercises the ragged last block
    # (B=37 -> TB=24, grid=2, second block only partially valid).
    x2 = jax.random.normal(key_x2, (37, 784), dtype=jnp.float32)
    out2 = jax.block_until_ready(reseau_forward(x2, params, K))
    ref2 = reseau_forward_ref(x2, params, K)
    assert out2.shape == (37, n[-1]), f"bad shape {out2.shape}"
    assert jnp.allclose(out2, ref2, atol=1e-5, rtol=1e-5), "mismatch (test 2)"

    print("KERNEL_OK")
</pallas_src>

<mosaic_0001>
module attributes {stable_mosaic.version = 11 : i64} {
  func.func @_fused_mlp_kernel(%arg0: i32, %arg1: memref<8x784xf32, #tpu.memory_space<vmem>>, %arg2: memref<784x8xf32, #tpu.memory_space<vmem>>, %arg3: memref<1x8xf32, #tpu.memory_space<vmem>>, %arg4: memref<8x8xf32, #tpu.memory_space<vmem>>, %arg5: memref<1x8xf32, #tpu.memory_space<vmem>>, %arg6: memref<8x8xf32, #tpu.memory_space<vmem>>, %arg7: memref<1x8xf32, #tpu.memory_space<vmem>>, %arg8: memref<8x10xf32, #tpu.memory_space<vmem>>, %arg9: memref<1x10xf32, #tpu.memory_space<vmem>>, %arg10: memref<8x10xf32, #tpu.memory_space<vmem>>) attributes {dimension_semantics = [#tpu.dimension_semantics<parallel>], iteration_bounds = array<i64: 1>, scalar_prefetch = 0 : i64, scratch_operands = 0 : i64, tpu.core_type = #tpu.core_type<tc>, window_params = [{transform_indices = @transform_0, window_bounds = array<i64: 8, 784>}, {pipeline_mode = #tpu.pipeline_mode<synchronous>, transform_indices = @transform_1, window_bounds = array<i64: 784, 8>}, {pipeline_mode = #tpu.pipeline_mode<synchronous>, transform_indices = @transform_2, window_bounds = array<i64: 1, 8>}, {pipeline_mode = #tpu.pipeline_mode<synchronous>, transform_indices = @transform_3, window_bounds = array<i64: 8, 8>}, {pipeline_mode = #tpu.pipeline_mode<synchronous>, transform_indices = @transform_4, window_bounds = array<i64: 1, 8>}, {pipeline_mode = #tpu.pipeline_mode<synchronous>, transform_indices = @transform_5, window_bounds = array<i64: 8, 8>}, {pipeline_mode = #tpu.pipeline_mode<synchronous>, transform_indices = @transform_6, window_bounds = array<i64: 1, 8>}, {pipeline_mode = #tpu.pipeline_mode<synchronous>, transform_indices = @transform_7, window_bounds = array<i64: 8, 10>}, {pipeline_mode = #tpu.pipeline_mode<synchronous>, transform_indices = @transform_8, window_bounds = array<i64: 1, 10>}, {transform_indices = @transform_9, window_bounds = array<i64: 8, 10>}]} {
    %c0 = arith.constant 0 : index
    %c0_0 = arith.constant 0 : index
    %0 = vector.load %arg1[%c0, %c0_0] : memref<8x784xf32, #tpu.memory_space<vmem>>, vector<8x784xf32>
    %c0_1 = arith.constant 0 : index
    %c0_2 = arith.constant 0 : index
    %1 = vector.load %arg2[%c0_1, %c0_2] : memref<784x8xf32, #tpu.memory_space<vmem>>, vector<784x8xf32>
    %cst = arith.constant dense<0.000000e+00> : vector<8x8xf32>
    %2 = tpu.matmul %0, %1, %cst {dimension_numbers = #tpu.dot_dimension_numbers<[1], [0], [0], [1], [0, 0, 1, 1], [], []>} : vector<8x784xf32>, vector<784x8xf32>, vector<8x8xf32> -> vector<8x8xf32>
    %c0_3 = arith.constant 0 : index
    %c0_4 = arith.constant 0 : index
    %3 = vector.load %arg3[%c0_3, %c0_4] : memref<1x8xf32, #tpu.memory_space<vmem>>, vector<1x8xf32>
    %4 = vector.broadcast %3 : vector<1x8xf32> to vector<8x8xf32>
    %5 = arith.addf %2, %4 : vector<8x8xf32>
    %cst_5 = arith.constant 0.000000e+00 : f32
    %6 = vector.broadcast %cst_5 : f32 to vector<8x8xf32>
    %7 = arith.maximumf %5, %6 : vector<8x8xf32>
    %c0_6 = arith.constant 0 : index
    %c0_7 = arith.constant 0 : index
    %8 = vector.load %arg4[%c0_6, %c0_7] : memref<8x8xf32, #tpu.memory_space<vmem>>, vector<8x8xf32>
    %cst_8 = arith.constant dense<0.000000e+00> : vector<8x8xf32>
    %9 = tpu.matmul %7, %8, %cst_8 {dimension_numbers = #tpu.dot_dimension_numbers<[1], [0], [0], [1], [0, 0, 1, 1], [], []>} : vector<8x8xf32>, vector<8x8xf32>, vector<8x8xf32> -> vector<8x8xf32>
    %c0_9 = arith.constant 0 : index
    %c0_10 = arith.constant 0 : index
    %10 = vector.load %arg5[%c0_9, %c0_10] : memref<1x8xf32, #tpu.memory_space<vmem>>, vector<1x8xf32>
    %11 = vector.broadcast %10 : vector<1x8xf32> to vector<8x8xf32>
    %12 = arith.addf %9, %11 : vector<8x8xf32>
    %cst_11 = arith.constant 0.000000e+00 : f32
    %13 = vector.broadcast %cst_11 : f32 to vector<8x8xf32>
    %14 = arith.maximumf %12, %13 : vector<8x8xf32>
    %c0_12 = arith.constant 0 : index
    %c0_13 = arith.constant 0 : index
    %15 = vector.load %arg6[%c0_12, %c0_13] : memref<8x8xf32, #tpu.memory_space<vmem>>, vector<8x8xf32>
    %cst_14 = arith.constant dense<0.000000e+00> : vector<8x8xf32>
    %16 = tpu.matmul %14, %15, %cst_14 {dimension_numbers = #tpu.dot_dimension_numbers<[1], [0], [0], [1], [0, 0, 1, 1], [], []>} : vector<8x8xf32>, vector<8x8xf32>, vector<8x8xf32> -> vector<8x8xf32>
    %c0_15 = arith.constant 0 : index
    %c0_16 = arith.constant 0 : index
    %17 = vector.load %arg7[%c0_15, %c0_16] : memref<1x8xf32, #tpu.memory_space<vmem>>, vector<1x8xf32>
    %18 = vector.broadcast %17 : vector<1x8xf32> to vector<8x8xf32>
    %19 = arith.addf %16, %18 : vector<8x8xf32>
    %cst_17 = arith.constant 0.000000e+00 : f32
    %20 = vector.broadcast %cst_17 : f32 to vector<8x8xf32>
    %21 = arith.maximumf %19, %20 : vector<8x8xf32>
    %c0_18 = arith.constant 0 : index
    %c0_19 = arith.constant 0 : index
    %22 = vector.load %arg8[%c0_18, %c0_19] : memref<8x10xf32, #tpu.memory_space<vmem>>, vector<8x10xf32>
    %cst_20 = arith.constant dense<0.000000e+00> : vector<8x10xf32>
    %23 = tpu.matmul %21, %22, %cst_20 {dimension_numbers = #tpu.dot_dimension_numbers<[1], [0], [0], [1], [0, 0, 1, 1], [], []>} : vector<8x8xf32>, vector<8x10xf32>, vector<8x10xf32> -> vector<8x10xf32>
    %c0_21 = arith.constant 0 : index
    %c0_22 = arith.constant 0 : index
    %24 = vector.load %arg9[%c0_21, %c0_22] : memref<1x10xf32, #tpu.memory_space<vmem>>, vector<1x10xf32>
    %25 = vector.broadcast %24 : vector<1x10xf32> to vector<8x10xf32>
    %26 = arith.addf %23, %25 : vector<8x10xf32>
    %c0_23 = arith.constant 0 : index
    %c0_24 = arith.constant 0 : index
    %27 = vector.load %arg10[%c0_23, %c0_24] : memref<8x10xf32, #tpu.memory_space<vmem>>, vector<8x10xf32>
    tpu.vector_store %arg10[%c0_23, %c0_24], %26 {strides = array<i32>} : memref<8x10xf32, #tpu.memory_space<vmem>>, vector<8x10xf32>,
    return
  }
  func.func @transform_0(%arg0: i32) -> (i32, i32) {
    %c0_i32 = arith.constant 0 : i32
    %c0_i32_0 = arith.constant 0 : i32
    return %arg0, %c0_i32 : i32, i32
  }
  func.func @transform_1(%arg0: i32) -> (i32, i32) {
    %c0_i32 = arith.constant 0 : i32
    %c0_i32_0 = arith.constant 0 : i32
    %c0_i32_1 = arith.constant 0 : i32
    return %c0_i32, %c0_i32_0 : i32, i32
  }
  func.func @transform_2(%arg0: i32) -> (i32, i32) {
    %c0_i32 = arith.constant 0 : i32
    %c0_i32_0 = arith.constant 0 : i32
    %c0_i32_1 = arith.constant 0 : i32
    return %c0_i32, %c0_i32_0 : i32, i32
  }
  func.func @transform_3(%arg0: i32) -> (i32, i32) {
    %c0_i32 = arith.constant 0 : i32
    %c0_i32_0 = arith.constant 0 : i32
    %c0_i32_1 = arith.constant 0 : i32
    return %c0_i32, %c0_i32_0 : i32, i32
  }
  func.func @transform_4(%arg0: i32) -> (i32, i32) {
    %c0_i32 = arith.constant 0 : i32
    %c0_i32_0 = arith.constant 0 : i32
    %c0_i32_1 = arith.constant 0 : i32
    return %c0_i32, %c0_i32_0 : i32, i32
  }
  func.func @transform_5(%arg0: i32) -> (i32, i32) {
    %c0_i32 = arith.constant 0 : i32
    %c0_i32_0 = arith.constant 0 : i32
    %c0_i32_1 = arith.constant 0 : i32
    return %c0_i32, %c0_i32_0 : i32, i32
  }
  func.func @transform_6(%arg0: i32) -> (i32, i32) {
    %c0_i32 = arith.constant 0 : i32
    %c0_i32_0 = arith.constant 0 : i32
    %c0_i32_1 = arith.constant 0 : i32
    return %c0_i32, %c0_i32_0 : i32, i32
  }
  func.func @transform_7(%arg0: i32) -> (i32, i32) {
    %c0_i32 = arith.constant 0 : i32
    %c0_i32_0 = arith.constant 0 : i32
    %c0_i32_1 = arith.constant 0 : i32
    return %c0_i32, %c0_i32_0 : i32, i32
  }
  func.func @transform_8(%arg0: i32) -> (i32, i32) {
    %c0_i32 = arith.constant 0 : i32
    %c0_i32_0 = arith.constant 0 : i32
    %c0_i32_1 = arith.constant 0 : i32
    return %c0_i32, %c0_i32_0 : i32, i32
  }
  func.func @transform_9(%arg0: i32) -> (i32, i32) {
    %c0_i32 = arith.constant 0 : i32
    %c0_i32_0 = arith.constant 0 : i32
    return %arg0, %c0_i32 : i32, i32
  }
}

</mosaic_0001>

<llo_original>
// kernel: tpu_custom_call.1
$region0: #{tpu_custom_call.1}
  #allocation0 [shape = 'u32[]', space=smem, size = 0x4, offset = 0x4, fixed_abs, tag = 'smem constant byte address 0x4 - core index']
  #allocation1 [shape = 'u32[144,128]{1,0:T(1,128)}', space=vmem, size = 0x12000, scoped, tag = 'internal scratch']
  %s0 = inlined_call_operand.vmem [shape: f32[2,784], index: 0, kind: input, shape index: {}]
  %s1 = inlined_call_operand.vmem [shape: f32[784,8], index: 1, kind: input, shape index: {}]
  %s2 = inlined_call_operand.vmem [shape: f32[1,8], index: 2, kind: input, shape index: {}]
  %s3 = inlined_call_operand.vmem [shape: f32[8,8], index: 3, kind: input, shape index: {}]
  %s4 = inlined_call_operand.vmem [shape: f32[1,8], index: 4, kind: input, shape index: {}]
  %s5 = inlined_call_operand.vmem [shape: f32[8,8], index: 5, kind: input, shape index: {}]
  %s6 = inlined_call_operand.vmem [shape: f32[1,8], index: 6, kind: input, shape index: {}]
  %s7 = inlined_call_operand.vmem [shape: f32[8,10], index: 7, kind: input, shape index: {}]
  %s8 = inlined_call_operand.vmem [shape: f32[1,10], index: 8, kind: input, shape index: {}]
  %s9 = inlined_call_operand.hbm [shape: f32[2,10], index: 9, kind: output, shape index: {}]
  %s10 = sld [smem:[#allocation0]]
  $region46: #{tpu_custom_call.1} parent=0
    _
  %s12 = ssub.s32 1, %s10
  %s13 = scalar_select 0, %s12, %s10
  $region1: #{tpu_custom_call.1} parent=0
    #allocation2 [shape = 'u8[4096]{0}', space=vmem, size = 0x1000, scoped, tag = 'output window, operand 0, single buffered']
    #allocation3 [shape = 's32[1]{0}', space=sflag, size = 0x4, scoped, tag = 'scoped memory for tpu_custom_call.1']
    %14 = vsyncpa [#allocation3], 0
    // Predicated region
    $region2: #{tpu_custom_call.1} parent=1 // pred_check
      _
    $region3: #{tpu_custom_call.1} parent=1 // pred_check_branch
      %16 = sbr.rel (0) target = $region5
    $region4: #{tpu_custom_call.1} parent=1 // pred_region
      _
    $region5: #{tpu_custom_call.1} parent=1 // pred_fallthru
      _
    // Predicated region
    $region6: #{tpu_custom_call.1} parent=1 // pred_check
      _
    $region7: #{tpu_custom_call.1} parent=1 // pred_check_branch
      %18 = sbr.rel (0) target = $region9
    $region8: #{tpu_custom_call.1} parent=1 // pred_region
      _
    $region9: #{tpu_custom_call.1} parent=1 // pred_fallthru
      _
    // Predicated region
    $region10: #{tpu_custom_call.1} parent=1 // pred_check
      _
    $region11: #{tpu_custom_call.1} parent=1 // pred_check_branch
      %20 = sbr.rel (0) target = $region13
    $region12: #{tpu_custom_call.1} parent=1 // pred_region
      _
    $region13: #{tpu_custom_call.1} parent=1 // pred_fallthru
      _
    // Predicated region
    $region14: #{tpu_custom_call.1} parent=1 // pred_check
      _
    $region15: #{tpu_custom_call.1} parent=1 // pred_check_branch
      %22 = sbr.rel (0) target = $region17
    $region16: #{tpu_custom_call.1} parent=1 // pred_region
      _
    $region17: #{tpu_custom_call.1} parent=1 // pred_fallthru
      _
    // Predicated region
    $region18: #{tpu_custom_call.1} parent=1 // pred_check
      _
    $region19: #{tpu_custom_call.1} parent=1 // pred_check_branch
      %24 = sbr.rel (0) target = $region21
    $region20: #{tpu_custom_call.1} parent=1 // pred_region
      _
    $region21: #{tpu_custom_call.1} parent=1 // pred_fallthru
      _
    // Predicated region
    $region22: #{tpu_custom_call.1} parent=1 // pred_check
      _
    $region23: #{tpu_custom_call.1} parent=1 // pred_check_branch
      %26 = sbr.rel (0) target = $region25
    $region24: #{tpu_custom_call.1} parent=1 // pred_region
      _
    $region25: #{tpu_custom_call.1} parent=1 // pred_fallthru
      _
    // Predicated region
    $region26: #{tpu_custom_call.1} parent=1 // pred_check
      _
    $region27: #{tpu_custom_call.1} parent=1 // pred_check_branch
      %28 = sbr.rel (0) target = $region29
    $region28: #{tpu_custom_call.1} parent=1 // pred_region
      _
    $region29: #{tpu_custom_call.1} parent=1 // pred_fallthru
      _
    // Predicated region
    $region30: #{tpu_custom_call.1} parent=1 // pred_check
      _
    $region31: #{tpu_custom_call.1} parent=1 // pred_check_branch
      %30 = sbr.rel (0) target = $region33
    $region32: #{tpu_custom_call.1} parent=1 // pred_region
      _
    $region33: #{tpu_custom_call.1} parent=1 // pred_fallthru
      _
    // Predicated region
    $region34: #{tpu_custom_call.1} parent=1 // pred_check
      _
    $region35: #{tpu_custom_call.1} parent=1 // pred_check_branch
      %32 = sbr.rel (0) target = $region37
    $region36: #{tpu_custom_call.1} parent=1 // pred_region
      _
    $region37: #{tpu_custom_call.1} parent=1 // pred_fallthru
      _
    %v33 = vld [vmem:[%s0] sm:$0xff]
    %v34 = vld [vmem:[%s0 + $0x8] sm:$0x3f]
    %v35 = vld [vmem:[%s0 + $0xe] sm:$0xff]
    %v36 = vld [vmem:[%s0 + $0x16] sm:$0x3f]
    %v37 = vld [vmem:[%s0 + $0x1c] sm:$0xff]
    %v38 = vld [vmem:[%s0 + $0x24] sm:$0x3f]
    %v39 = vld [vmem:[%s0 + $0x2a] sm:$0xff]
    %v40 = vld [vmem:[%s0 + $0x32] sm:$0x3f]
    %v41 = vld [vmem:[%s1] sm:$0xff]
    %v42 = vld [vmem:[%s1 + $0x8] sm:$0xff]
    %v43 = vld [vmem:[%s1 + $0x10] sm:$0xff]
    %v44 = vld [vmem:[%s1 + $0x18] sm:$0xff]
    %v45 = vld [vmem:[%s1 + $0x20] sm:$0xff]
    %v46 = vld [vmem:[%s1 + $0x28] sm:$0xff]
    %v47 = vld [vmem:[%s1 + $0x30] sm:$0xff]
    %v48 = vld [vmem:[%s1 + $0x38] sm:$0xff]
    %v49 = vld [vmem:[%s1 + $0x40] sm:$0xff]
    %v50 = vld [vmem:[%s1 + $0x48] sm:$0xff]
    %v51 = vld [vmem:[%s1 + $0x50] sm:$0xff]
    %v52 = vld [vmem:[%s1 + $0x58] sm:$0xff]
    %v53 = vld [vmem:[%s1 + $0x60] sm:$0xff]
    %v54 = vld [vmem:[%s1 + $0x68] sm:$0xff]
    %v55 = vld [vmem:[%s1 + $0x70] sm:$0xff]
    %v56 = vld [vmem:[%s1 + $0x78] sm:$0xff]
    %v57 = vld [vmem:[%s1 + $0x80] sm:$0xff]
    %v58 = vld [vmem:[%s1 + $0x88] sm:$0xff]
    %v59 = vld [vmem:[%s1 + $0x90] sm:$0xff]
    %v60 = vld [vmem:[%s1 + $0x98] sm:$0xff]
    %v61 = vld [vmem:[%s1 + $0xa0] sm:$0xff]
    %v62 = vld [vmem:[%s1 + $0xa8] sm:$0xff]
    %v63 = vld [vmem:[%s1 + $0xb0] sm:$0xff]
    %v64 = vld [vmem:[%s1 + $0xb8] sm:$0xff]
    %v65 = vld [vmem:[%s1 + $0xc0] sm:$0xff]
    %v66 = vld [vmem:[%s1 + $0xc8] sm:$0xff]
    %v67 = vld [vmem:[%s1 + $0xd0] sm:$0xff]
    %v68 = vld [vmem:[%s1 + $0xd8] sm:$0xff]
    %v69 = vld [vmem:[%s1 + $0xe0] sm:$0xff]
    %v70 = vld [vmem:[%s1 + $0xe8] sm:$0xff]
    %v71 = vld [vmem:[%s1 + $0xf0] sm:$0xff]
    %v72 = vld [vmem:[%s1 + $0xf8] sm:$0xff]
    %v73 = vld [vmem:[%s1 + $0x100] sm:$0xff]
    %v74 = vld [vmem:[%s1 + $0x108] sm:$0xff]
    %v75 = vld [vmem:[%s1 + $0x110] sm:$0xff]
    %v76 = vld [vmem:[%s1 + $0x118] sm:$0xff]
    %v77 = vld [vmem:[%s1 + $0x120] sm:$0xff]
    %v78 = vld [vmem:[%s1 + $0x128] sm:$0xff]
    %v79 = vld [vmem:[%s1 + $0x130] sm:$0xff]
    %v80 = vld [vmem:[%s1 + $0x138] sm:$0xff]
    %v81 = vld [vmem:[%s1 + $0x140] sm:$0xff]
    %v82 = vld [vmem:[%s1 + $0x148] sm:$0xff]
    %v83 = vld [vmem:[%s1 + $0x150] sm:$0xff]
    %v84 = vld [vmem:[%s1 + $0x158] sm:$0xff]
    %v85 = vld [vmem:[%s1 + $0x160] sm:$0xff]
    %v86 = vld [vmem:[%s1 + $0x168] sm:$0xff]
    %v87 = vld [vmem:[%s1 + $0x170] sm:$0xff]
    %v88 = vld [vmem:[%s1 + $0x178] sm:$0xff]
    %v89 = vld [vmem:[%s1 + $0x180] sm:$0xff]
    %v90 = vld [vmem:[%s1 + $0x188] sm:$0xff]
    %v91 = vld [vmem:[%s1 + $0x190] sm:$0xff]
    %v92 = vld [vmem:[%s1 + $0x198] sm:$0xff]
    %v93 = vld [vmem:[%s1 + $0x1a0] sm:$0xff]
    %v94 = vld [vmem:[%s1 + $0x1a8] sm:$0xff]
    %v95 = vld [vmem:[%s1 + $0x1b0] sm:$0xff]
    %v96 = vld [vmem:[%s1 + $0x1b8] sm:$0xff]
    %v97 = vld [vmem:[%s1 + $0x1c0] sm:$0xff]
    %v98 = vld [vmem:[%s1 + $0x1c8] sm:$0xff]
    %v99 = vld [vmem:[%s1 + $0x1d0] sm:$0xff]
    %v100 = vld [vmem:[%s1 + $0x1d8] sm:$0xff]
    %v101 = vld [vmem:[%s1 + $0x1e0] sm:$0xff]
    %v102 = vld [vmem:[%s1 + $0x1e8] sm:$0xff]
    %v103 = vld [vmem:[%s1 + $0x1f0] sm:$0xff]
    %v104 = vld [vmem:[%s1 + $0x1f8] sm:$0xff]
    %v105 = vld [vmem:[%s1 + $0x200] sm:$0xff]
    %v106 = vld [vmem:[%s1 + $0x208] sm:$0xff]
    %v107 = vld [vmem:[%s1 + $0x210] sm:$0xff]
    %v108 = vld [vmem:[%s1 + $0x218] sm:$0xff]
    %v109 = vld [vmem:[%s1 + $0x220] sm:$0xff]
    %v110 = vld [vmem:[%s1 + $0x228] sm:$0xff]
    %v111 = vld [vmem:[%s1 + $0x230] sm:$0xff]
    %v112 = vld [vmem:[%s1 + $0x238] sm:$0xff]
    %v113 = vld [vmem:[%s1 + $0x240] sm:$0xff]
    %v114 = vld [vmem:[%s1 + $0x248] sm:$0xff]
    %v115 = vld [vmem:[%s1 + $0x250] sm:$0xff]
    %v116 = vld [vmem:[%s1 + $0x258] sm:$0xff]
    %v117 = vld [vmem:[%s1 + $0x260] sm:$0xff]
    %v118 = vld [vmem:[%s1 + $0x268] sm:$0xff]
    %v119 = vld [vmem:[%s1 + $0x270] sm:$0xff]
    %v120 = vld [vmem:[%s1 + $0x278] sm:$0xff]
    %v121 = vld [vmem:[%s1 + $0x280] sm:$0xff]
    %v122 = vld [vmem:[%s1 + $0x288] sm:$0xff]
    %v123 = vld [vmem:[%s1 + $0x290] sm:$0xff]
    %v124 = vld [vmem:[%s1 + $0x298] sm:$0xff]
    %v125 = vld [vmem:[%s1 + $0x2a0] sm:$0xff]
    %v126 = vld [vmem:[%s1 + $0x2a8] sm:$0xff]
    %v127 = vld [vmem:[%s1 + $0x2b0] sm:$0xff]
    %v128 = vld [vmem:[%s1 + $0x2b8] sm:$0xff]
    %v129 = vld [vmem:[%s1 + $0x2c0] sm:$0xff]
    %v130 = vld [vmem:[%s1 + $0x2c8] sm:$0xff]
    %v131 = vld [vmem:[%s1 + $0x2d0] sm:$0xff]
    %v132 = vld [vmem:[%s1 + $0x2d8] sm:$0xff]
    %v133 = vld [vmem:[%s1 + $0x2e0] sm:$0xff]
    %v134 = vld [vmem:[%s1 + $0x2e8] sm:$0xff]
    %v135 = vld [vmem:[%s1 + $0x2f0] sm:$0xff]
    %v136 = vld [vmem:[%s1 + $0x2f8] sm:$0xff]
    %v137 = vld [vmem:[%s1 + $0x300] sm:$0xff]
    %v138 = vld [vmem:[%s1 + $0x308] sm:$0xff]
    %v139 = vld [vmem:[%s2] sm:$0x1]
    %v141 = vlaneseq
    %v142 = vshrl.u32 %v141, 7
    %v143 = vsub.s32 0, %v142
    %v144 = vrot.slane %v139, %v143
    %v154 = vcombine.low %v33, %v35
    %v155 = vcombine.high %v33, %v35
    %v156 = vcombine.low %v37, %v39
    %v157 = vcombine.high %v37, %v39
    %v159 = vunpack.c.l.s4 1983009808
    %v160 = vunpack.c.0.s8 %v159
    %v161 = vlaneseq
    %v162 = vshrl.u32 %v161, 7
    %v163 = vsub.s32 %v160, %v162
    %v164 = vrot.slane %v154, %v163
    %v166 = vunpack.c.l.s4 1983009808
    %v167 = vunpack.c.0.s8 %v166
    %v168 = vlaneseq
    %v169 = vshrl.u32 %v168, 7
    %v170 = vsub.s32 %v167, %v169
    %v171 = vrot.slane %v155, %v170
    %v173 = vunpack.c.l.s4 1983009808
    %v174 = vunpack.c.0.s8 %v173
    %v175 = vlaneseq
    %v176 = vshrl.u32 %v175, 7
    %v177 = vsub.s32 %v174, %v176
    %v178 = vrot.slane %v156, %v177
    %v180 = vunpack.c.l.s4 1983009808
    %v181 = vunpack.c.0.s8 %v180
    %v182 = vlaneseq
    %v183 = vshrl.u32 %v182, 7
    %v184 = vsub.s32 %v181, %v183
    %v185 = vrot.slane %v157, %v184
    %v186 = vcombine.low %v164, %v178
    %v187 = vcombine.high %v164, %v178
    %v188 = vcombine.low %v171, %v185
    %v189 = vcombine.high %v171, %v185
    %v190 = vcombine.low %v34, %v36
    %v191 = vcombine.high %v34, %v36
    %v192 = vcombine.low %v38, %v40
    %v193 = vcombine.high %v38, %v40
    %v195 = vunpack.c.l.s4 1983009808
    %v196 = vunpack.c.0.s8 %v195
    %v197 = vlaneseq
    %v198 = vshrl.u32 %v197, 7
    %v199 = vsub.s32 %v196, %v198
    %v200 = vrot.slane %v190, %v199
    %v202 = vunpack.c.l.s4 1983009808
    %v203 = vunpack.c.0.s8 %v202
    %v204 = vlaneseq
    %v205 = vshrl.u32 %v204, 7
    %v206 = vsub.s32 %v203, %v205
    %v207 = vrot.slane %v191, %v206
    %v209 = vunpack.c.l.s4 1983009808
    %v210 = vunpack.c.0.s8 %v209
    %v211 = vlaneseq
    %v212 = vshrl.u32 %v211, 7
    %v213 = vsub.s32 %v210, %v212
    %v214 = vrot.slane %v192, %v213
    %v216 = vunpack.c.l.s4 1983009808
    %v217 = vunpack.c.0.s8 %v216
    %v218 = vlaneseq
    %v219 = vshrl.u32 %v218, 7
    %v220 = vsub.s32 %v217, %v219
    %v221 = vrot.slane %v193, %v220
    %v222 = vcombine.low %v200, %v214
    %v223 = vcombine.high %v200, %v214
    %v224 = vcombine.low %v207, %v221
    %vm231 = vcmask 130048
    %v232 = vsel %vm231, %v224, 0
    %234 = vmatprep.subr.mxu0 0.0
    %235 = vmatpush1.msra.mxu0 %v41
    %236 = vmatprep.subr.mxu0 0.0
    %237 = vmatpush1.msra.mxu0 %v42
    %238 = vmatprep.subr.mxu0 0.0
    %239 = vmatpush1.msra.mxu0 %v43
    %240 = vmatprep.subr.mxu0 0.0
    %241 = vmatpush1.msra.mxu0 %v44
    %242 = vmatprep.subr.mxu0 0.0
    %243 = vmatpush1.msra.mxu0 %v45
    %244 = vmatprep.subr.mxu0 0.0
    %245 = vmatpush1.msra.mxu0 %v46
    %246 = vmatprep.subr.mxu0 0.0
    %247 = vmatpush1.msra.mxu0 %v47
    %248 = vmatprep.subr.mxu0 0.0
    %249 = vmatpush1.msra.mxu0 %v48
    %250 = vmatprep.subr.mxu0 0.0
    %251 = vmatpush1.msra.mxu0 %v49
    %252 = vmatprep.subr.mxu0 0.0
    %253 = vmatpush1.msra.mxu0 %v50
    %254 = vmatprep.subr.mxu0 0.0
    %255 = vmatpush1.msra.mxu0 %v51
    %256 = vmatprep.subr.mxu0 0.0
    %257 = vmatpush1.msra.mxu0 %v52
    %258 = vmatprep.subr.mxu0 0.0
    %259 = vmatpush1.msra.mxu0 %v53
    %260 = vmatprep.subr.mxu0 0.0
    %261 = vmatpush1.msra.mxu0 %v54
    %262 = vmatprep.subr.mxu0 0.0
    %263 = vmatpush1.msra.mxu0 %v55
    %264 = vmatprep.subr.mxu0 0.0
    %265 = vmatpush1.msra.mxu0 %v56
    %266 = vmatprep.subr.mxu0 0.0
    %267 = vmatpush1.msra.mxu0 %v57
    %268 = vmatprep.subr.mxu0 0.0
    %269 = vmatpush1.msra.mxu0 %v58
    %270 = vmatprep.subr.mxu0 0.0
    %271 = vmatpush1.msra.mxu0 %v59
    %272 = vmatprep.subr.mxu0 0.0
    %273 = vmatpush1.msra.mxu0 %v60
    %274 = vmatprep.subr.mxu0 0.0
    %275 = vmatpush1.msra.mxu0 %v61
    %276 = vmatprep.subr.mxu0 0.0
    %277 = vmatpush1.msra.mxu0 %v62
    %278 = vmatprep.subr.mxu0 0.0
    %279 = vmatpush1.msra.mxu0 %v63
    %280 = vmatprep.subr.mxu0 0.0
    %281 = vmatpush1.msra.mxu0 %v64
    %282 = vmatprep.subr.mxu0 0.0
    %283 = vmatpush1.msra.mxu0 %v65
    %284 = vmatprep.subr.mxu0 0.0
    %285 = vmatpush1.msra.mxu0 %v66
    %286 = vmatprep.subr.mxu0 0.0
    %287 = vmatpush1.msra.mxu0 %v67
    %288 = vmatprep.subr.mxu0 0.0
    %289 = vmatpush1.msra.mxu0 %v68
    %290 = vmatprep.subr.mxu0 0.0
    %291 = vmatpush1.msra.mxu0 %v69
    %292 = vmatprep.subr.mxu0 0.0
    %293 = vmatpush1.msra.mxu0 %v70
    %294 = vmatprep.subr.mxu0 0.0
    %295 = vmatpush1.msra.mxu0 %v71
    %296 = vmatprep.subr.mxu0 0.0
    %297 = vmatpush1.msra.mxu0 %v72
    %298 = vmatprep.mubr.f32.mxu0 %v187
    %299 = vmatmul.mubr.f32.gmra.mrb[0].mxu0 %v186
    %v300 = vpop.f32.mrb[0].mxu0
    %v301 = vadd.f32 %v144, %v300
    %v302 = vpop.f32.mrb[0].mxu0
    %303 = vdwg.mxu0
    %304 = vmatprep.subr.mxu0 0.0
    %305 = vmatpush1.msra.mxu0 %v73
    %306 = vmatprep.subr.mxu0 0.0
    %307 = vmatpush1.msra.mxu0 %v74
    %308 = vmatprep.subr.mxu0 0.0
    %309 = vmatpush1.msra.mxu0 %v75
    %310 = vmatprep.subr.mxu0 0.0
    %311 = vmatpush1.msra.mxu0 %v76
    %312 = vmatprep.subr.mxu0 0.0
    %313 = vmatpush1.msra.mxu0 %v77
    %314 = vmatprep.subr.mxu0 0.0
    %315 = vmatpush1.msra.mxu0 %v78
    %316 = vmatprep.subr.mxu0 0.0
    %317 = vmatpush1.msra.mxu0 %v79
    %318 = vmatprep.subr.mxu0 0.0
    %319 = vmatpush1.msra.mxu0 %v80
    %320 = vmatprep.subr.mxu0 0.0
    %321 = vmatpush1.msra.mxu0 %v81
    %322 = vmatprep.subr.mxu0 0.0
    %323 = vmatpush1.msra.mxu0 %v82
    %324 = vmatprep.subr.mxu0 0.0
    %325 = vmatpush1.msra.mxu0 %v83
    %326 = vmatprep.subr.mxu0 0.0
    %327 = vmatpush1.msra.mxu0 %v84
    %328 = vmatprep.subr.mxu0 0.0
    %329 = vmatpush1.msra.mxu0 %v85
    %330 = vmatprep.subr.mxu0 0.0
    %331 = vmatpush1.msra.mxu0 %v86
    %332 = vmatprep.subr.mxu0 0.0
    %333 = vmatpush1.msra.mxu0 %v87
    %334 = vmatprep.subr.mxu0 0.0
    %335 = vmatpush1.msra.mxu0 %v88
    %336 = vmatprep.subr.mxu0 0.0
    %337 = vmatpush1.msra.mxu0 %v89
    %338 = vmatprep.subr.mxu0 0.0
    %339 = vmatpush1.msra.mxu0 %v90
    %340 = vmatprep.subr.mxu0 0.0
    %341 = vmatpush1.msra.mxu0 %v91
    %342 = vmatprep.subr.mxu0 0.0
    %343 = vmatpush1.msra.mxu0 %v92
    %344 = vmatprep.subr.mxu0 0.0
    %345 = vmatpush1.msra.mxu0 %v93
    %346 = vmatprep.subr.mxu0 0.0
    %347 = vmatpush1.msra.mxu0 %v94
    %348 = vmatprep.subr.mxu0 0.0
    %349 = vmatpush1.msra.mxu0 %v95
    %350 = vmatprep.subr.mxu0 0.0
    %351 = vmatpush1.msra.mxu0 %v96
    %352 = vmatprep.subr.mxu0 0.0
    %353 = vmatpush1.msra.mxu0 %v97
    %354 = vmatprep.subr.mxu0 0.0
    %355 = vmatpush1.msra.mxu0 %v98
    %356 = vmatprep.subr.mxu0 0.0
    %357 = vmatpush1.msra.mxu0 %v99
    %358 = vmatprep.subr.mxu0 0.0
    %359 = vmatpush1.msra.mxu0 %v100
    %360 = vmatprep.subr.mxu0 0.0
    %361 = vmatpush1.msra.mxu0 %v101
    %362 = vmatprep.subr.mxu0 0.0
    %363 = vmatpush1.msra.mxu0 %v102
    %364 = vmatprep.subr.mxu0 0.0
    %365 = vmatpush1.msra.mxu0 %v103
    %366 = vmatprep.subr.mxu0 0.0
    %367 = vmatpush1.msra.mxu0 %v104
    %368 = vmatprep.mubr.f32.mxu0 %v189
    %369 = vmatmul.mubr.f32.gmra.mrb[0].mxu0 %v188
    %v370 = vpop.f32.mrb[0].mxu0
    %v371 = vadd.f32 %v301, %v370
    %v372 = vpop.f32.mrb[0].mxu0
    %373 = vdwg.mxu0
    %374 = vmatprep.subr.mxu0 0.0
    %375 = vmatpush1.msra.mxu0 %v105
    %376 = vmatprep.subr.mxu0 0.0
    %377 = vmatpush1.msra.mxu0 %v106
    %378 = vmatprep.subr.mxu0 0.0
    %379 = vmatpush1.msra.mxu0 %v107
    %380 = vmatprep.subr.mxu0 0.0
    %381 = vmatpush1.msra.mxu0 %v108
    %382 = vmatprep.subr.mxu0 0.0
    %383 = vmatpush1.msra.mxu0 %v109
    %384 = vmatprep.subr.mxu0 0.0
    %385 = vmatpush1.msra.mxu0 %v110
    %386 = vmatprep.subr.mxu0 0.0
    %387 = vmatpush1.msra.mxu0 %v111
    %388 = vmatprep.subr.mxu0 0.0
    %389 = vmatpush1.msra.mxu0 %v112
    %390 = vmatprep.subr.mxu0 0.0
    %391 = vmatpush1.msra.mxu0 %v113
    %392 = vmatprep.subr.mxu0 0.0
    %393 = vmatpush1.msra.mxu0 %v114
    %394 = vmatprep.subr.mxu0 0.0
    %395 = vmatpush1.msra.mxu0 %v115
    %396 = vmatprep.subr.mxu0 0.0
    %397 = vmatpush1.msra.mxu0 %v116
    %398 = vmatprep.subr.mxu0 0.0
    %399 = vmatpush1.msra.mxu0 %v117
    %400 = vmatprep.subr.mxu0 0.0
    %401 = vmatpush1.msra.mxu0 %v118
    %402 = vmatprep.subr.mxu0 0.0
    %403 = vmatpush1.msra.mxu0 %v119
    %404 = vmatprep.subr.mxu0 0.0
    %405 = vmatpush1.msra.mxu0 %v120
    %406 = vmatprep.subr.mxu0 0.0
    %407 = vmatpush1.msra.mxu0 %v121
    %408 = vmatprep.subr.mxu0 0.0
    %409 = vmatpush1.msra.mxu0 %v122
    %410 = vmatprep.subr.mxu0 0.0
    %411 = vmatpush1.msra.mxu0 %v123
    %412 = vmatprep.subr.mxu0 0.0
    %413 = vmatpush1.msra.mxu0 %v124
    %414 = vmatprep.subr.mxu0 0.0
    %415 = vmatpush1.msra.mxu0 %v125
    %416 = vmatprep.subr.mxu0 0.0
    %417 = vmatpush1.msra.mxu0 %v126
    %418 = vmatprep.subr.mxu0 0.0
    %419 = vmatpush1.msra.mxu0 %v127
    %420 = vmatprep.subr.mxu0 0.0
    %421 = vmatpush1.msra.mxu0 %v128
    %422 = vmatprep.subr.mxu0 0.0
    %423 = vmatpush1.msra.mxu0 %v129
    %424 = vmatprep.subr.mxu0 0.0
    %425 = vmatpush1.msra.mxu0 %v130
    %426 = vmatprep.subr.mxu0 0.0
    %427 = vmatpush1.msra.mxu0 %v131
    %428 = vmatprep.subr.mxu0 0.0
    %429 = vmatpush1.msra.mxu0 %v132
    %430 = vmatprep.subr.mxu0 0.0
    %431 = vmatpush1.msra.mxu0 %v133
    %432 = vmatprep.subr.mxu0 0.0
    %433 = vmatpush1.msra.mxu0 %v134
    %434 = vmatprep.subr.mxu0 0.0
    %435 = vmatpush1.msra.mxu0 %v135
    %436 = vmatprep.subr.mxu0 0.0
    %437 = vmatpush1.msra.mxu0 %v136
    %438 = vmatprep.mubr.f32.mxu0 %v223
    %439 = vmatmul.mubr.f32.gmra.mrb[0].mxu0 %v222
    %v440 = vpop.f32.mrb[0].mxu0
    %v441 = vadd.f32 %v371, %v440
    %v442 = vpop.f32.mrb[0].mxu0
    %443 = vdwg.mxu0
    %444 = vmatprep.subr.mxu0 0.0
    %445 = vmatpush1.msra.mxu0 %v137
    %446 = vmatprep.subr.mxu0 0.0
    %447 = vmatpush1.msra.mxu0 %v138
    %448 = vmatprep.subr.mxu0 0.0
    %449 = vmatpush1.msra.mxu0 0.0
    %450 = vmatprep.subr.mxu0 0.0
    %451 = vmatpush1.msra.mxu0 0.0
    %452 = vmatprep.subr.mxu0 0.0
    %453 = vmatpush1.msra.mxu0 0.0
    %454 = vmatprep.subr.mxu0 0.0
    %455 = vmatpush1.msra.mxu0 0.0
    %456 = vmatprep.subr.mxu0 0.0
    %457 = vmatpush1.msra.mxu0 0.0
    %458 = vmatprep.subr.mxu0 0.0
    %459 = vmatpush1.msra.mxu0 0.0
    %460 = vmatprep.subr.mxu0 0.0
    %461 = vmatpush1.msra.mxu0 0.0
    %462 = vmatprep.subr.mxu0 0.0
    %463 = vmatpush1.msra.mxu0 0.0
    %464 = vmatprep.subr.mxu0 0.0
    %465 = vmatpush1.msra.mxu0 0.0
    %466 = vmatprep.subr.mxu0 0.0
    %467 = vmatpush1.msra.mxu0 0.0
    %468 = vmatprep.subr.mxu0 0.0
    %469 = vmatpush1.msra.mxu0 0.0
    %470 = vmatprep.subr.mxu0 0.0
    %471 = vmatpush1.msra.mxu0 0.0
    %472 = vmatprep.subr.mxu0 0.0
    %473 = vmatpush1.msra.mxu0 0.0
    %474 = vmatprep.subr.mxu0 0.0
    %475 = vmatpush1.msra.mxu0 0.0
    %476 = vmatprep.subr.mxu0 0.0
    %477 = vmatpush1.msra.mxu0 0.0
    %478 = vmatprep.subr.mxu0 0.0
    %479 = vmatpush1.msra.mxu0 0.0
    %480 = vmatprep.subr.mxu0 0.0
    %481 = vmatpush1.msra.mxu0 0.0
    %482 = vmatprep.subr.mxu0 0.0
    %483 = vmatpush1.msra.mxu0 0.0
    %484 = vmatprep.subr.mxu0 0.0
    %485 = vmatpush1.msra.mxu0 0.0
    %486 = vmatprep.subr.mxu0 0.0
    %487 = vmatpush1.msra.mxu0 0.0
    %488 = vmatprep.subr.mxu0 0.0
    %489 = vmatpush1.msra.mxu0 0.0
    %490 = vmatprep.subr.mxu0 0.0
    %491 = vmatpush1.msra.mxu0 0.0
    %492 = vmatprep.subr.mxu0 0.0
    %493 = vmatpush1.msra.mxu0 0.0
    %494 = vmatprep.subr.mxu0 0.0
    %495 = vmatpush1.msra.mxu0 0.0
    %496 = vmatprep.subr.mxu0 0.0
    %497 = vmatpush1.msra.mxu0 0.0
    %498 = vmatprep.subr.mxu0 0.0
    %499 = vmatpush1.msra.mxu0 0.0
    %500 = vmatprep.subr.mxu0 0.0
    %501 = vmatpush1.msra.mxu0 0.0
    %502 = vmatprep.subr.mxu0 0.0
    %503 = vmatpush1.msra.mxu0 0.0
    %504 = vmatprep.subr.mxu0 0.0
    %505 = vmatpush1.msra.mxu0 0.0
    %506 = vmatprep.subr.mxu0 0.0
    %507 = vmatpush1.msra.mxu0 0.0
    %508 = vmatprep.mubr.f32.mxu0 0.0
    %509 = vmatmul.mubr.f32.gmra.mrb[0].mxu0 %v232
    %v510 = vpop.f32.mrb[0].mxu0
    %v511 = vadd.f32 %v441, %v510
    %v512 = vpop.f32.mrb[0].mxu0
    %513 = vdwg.mxu0
    %v514 = vmax.f32 %v511, 0.0
    %v515 = vld [vmem:[%s3] sm:$0xff]
    %v516 = vld [vmem:[%s4] sm:$0x1]
    %v518 = vlaneseq
    %v519 = vshrl.u32 %v518, 7
    %v520 = vsub.s32 0, %v519
    %v521 = vrot.slane %v516, %v520
    %vm523 = vcmask 64512
    %v525 = vsel %vm523, %v514, 0
    %527 = vmatprep.subr.mxu0 0.0
    %528 = vmatpush1.msra.mxu0 %v515
    %529 = vmatprep.subr.mxu0 0.0
    %530 = vmatpush1.msra.mxu0 0.0
    %531 = vmatprep.subr.mxu0 0.0
    %532 = vmatpush1.msra.mxu0 0.0
    %533 = vmatprep.subr.mxu0 0.0
    %534 = vmatpush1.msra.mxu0 0.0
    %535 = vmatprep.subr.mxu0 0.0
    %536 = vmatpush1.msra.mxu0 0.0
    %537 = vmatprep.subr.mxu0 0.0
    %538 = vmatpush1.msra.mxu0 0.0
    %539 = vmatprep.subr.mxu0 0.0
    %540 = vmatpush1.msra.mxu0 0.0
    %541 = vmatprep.subr.mxu0 0.0
    %542 = vmatpush1.msra.mxu0 0.0
    %543 = vmatprep.subr.mxu0 0.0
    %544 = vmatpush1.msra.mxu0 0.0
    %545 = vmatprep.subr.mxu0 0.0
    %546 = vmatpush1.msra.mxu0 0.0
    %547 = vmatprep.subr.mxu0 0.0
    %548 = vmatpush1.msra.mxu0 0.0
    %549 = vmatprep.subr.mxu0 0.0
    %550 = vmatpush1.msra.mxu0 0.0
    %551 = vmatprep.subr.mxu0 0.0
    %552 = vmatpush1.msra.mxu0 0.0
    %553 = vmatprep.subr.mxu0 0.0
    %554 = vmatpush1.msra.mxu0 0.0
    %555 = vmatprep.subr.mxu0 0.0
    %556 = vmatpush1.msra.mxu0 0.0
    %557 = vmatprep.subr.mxu0 0.0
    %558 = vmatpush1.msra.mxu0 0.0
    %559 = vmatprep.subr.mxu0 0.0
    %560 = vmatpush1.msra.mxu0 0.0
    %561 = vmatprep.subr.mxu0 0.0
    %562 = vmatpush1.msra.mxu0 0.0
    %563 = vmatprep.subr.mxu0 0.0
    %564 = vmatpush1.msra.mxu0 0.0
    %565 = vmatprep.subr.mxu0 0.0
    %566 = vmatpush1.msra.mxu0 0.0
    %567 = vmatprep.subr.mxu0 0.0
    %568 = vmatpush1.msra.mxu0 0.0
    %569 = vmatprep.subr.mxu0 0.0
    %570 = vmatpush1.msra.mxu0 0.0
    %571 = vmatprep.subr.mxu0 0.0
    %572 = vmatpush1.msra.mxu0 0.0
    %573 = vmatprep.subr.mxu0 0.0
    %574 = vmatpush1.msra.mxu0 0.0
    %575 = vmatprep.subr.mxu0 0.0
    %576 = vmatpush1.msra.mxu0 0.0
    %577 = vmatprep.subr.mxu0 0.0
    %578 = vmatpush1.msra.mxu0 0.0
    %579 = vmatprep.subr.mxu0 0.0
    %580 = vmatpush1.msra.mxu0 0.0
    %581 = vmatprep.subr.mxu0 0.0
    %582 = vmatpush1.msra.mxu0 0.0
    %583 = vmatprep.subr.mxu0 0.0
    %584 = vmatpush1.msra.mxu0 0.0
    %585 = vmatprep.subr.mxu0 0.0
    %586 = vmatpush1.msra.mxu0 0.0
    %587 = vmatprep.subr.mxu0 0.0
    %588 = vmatpush1.msra.mxu0 0.0
    %589 = vmatprep.subr.mxu0 0.0
    %590 = vmatpush1.msra.mxu0 0.0
    %591 = vmatprep.mubr.f32.mxu0 0.0
    %592 = vmatmul.mubr.f32.gmra.mrb[0].mxu0 %v525
    %v593 = vpop.f32.mrb[0].mxu0
    %v594 = vadd.f32 %v521, %v593
    %v595 = vpop.f32.mrb[0].mxu0
    %596 = vdwg.mxu0
    %v597 = vmax.f32 %v594, 0.0
    %v598 = vld [vmem:[%s5] sm:$0xff]
    %v599 = vld [vmem:[%s6] sm:$0x1]
    %v601 = vlaneseq
    %v602 = vshrl.u32 %v601, 7
    %v603 = vsub.s32 0, %v602
    %v604 = vrot.slane %v599, %v603
    %v607 = vsel %vm523, %v597, 0
    %609 = vmatprep.subr.mxu0 0.0
    %610 = vmatpush1.msra.mxu0 %v598
    %611 = vmatprep.subr.mxu0 0.0
    %612 = vmatpush1.msra.mxu0 0.0
    %613 = vmatprep.subr.mxu0 0.0
    %614 = vmatpush1.msra.mxu0 0.0
    %615 = vmatprep.subr.mxu0 0.0
    %616 = vmatpush1.msra.mxu0 0.0
    %617 = vmatprep.subr.mxu0 0.0
    %618 = vmatpush1.msra.mxu0 0.0
    %619 = vmatprep.subr.mxu0 0.0
    %620 = vmatpush1.msra.mxu0 0.0
    %621 = vmatprep.subr.mxu0 0.0
    %622 = vmatpush1.msra.mxu0 0.0
    %623 = vmatprep.subr.mxu0 0.0
    %624 = vmatpush1.msra.mxu0 0.0
    %625 = vmatprep.subr.mxu0 0.0
    %626 = vmatpush1.msra.mxu0 0.0
    %627 = vmatprep.subr.mxu0 0.0
    %628 = vmatpush1.msra.mxu0 0.0
    %629 = vmatprep.subr.mxu0 0.0
    %630 = vmatpush1.msra.mxu0 0.0
    %631 = vmatprep.subr.mxu0 0.0
    %632 = vmatpush1.msra.mxu0 0.0
    %633 = vmatprep.subr.mxu0 0.0
    %634 = vmatpush1.msra.mxu0 0.0
    %635 = vmatprep.subr.mxu0 0.0
    %636 = vmatpush1.msra.mxu0 0.0
    %637 = vmatprep.subr.mxu0 0.0
    %638 = vmatpush1.msra.mxu0 0.0
    %639 = vmatprep.subr.mxu0 0.0
    %640 = vmatpush1.msra.mxu0 0.0
    %641 = vmatprep.subr.mxu0 0.0
    %642 = vmatpush1.msra.mxu0 0.0
    %643 = vmatprep.subr.mxu0 0.0
    %644 = vmatpush1.msra.mxu0 0.0
    %645 = vmatprep.subr.mxu0 0.0
    %646 = vmatpush1.msra.mxu0 0.0
    %647 = vmatprep.subr.mxu0 0.0
    %648 = vmatpush1.msra.mxu0 0.0
    %649 = vmatprep.subr.mxu0 0.0
    %650 = vmatpush1.msra.mxu0 0.0
    %651 = vmatprep.subr.mxu0 0.0
    %652 = vmatpush1.msra.mxu0 0.0
    %653 = vmatprep.subr.mxu0 0.0
    %654 = vmatpush1.msra.mxu0 0.0
    %655 = vmatprep.subr.mxu0 0.0
    %656 = vmatpush1.msra.mxu0 0.0
    %657 = vmatprep.subr.mxu0 0.0
    %658 = vmatpush1.msra.mxu0 0.0
    %659 = vmatprep.subr.mxu0 0.0
    %660 = vmatpush1.msra.mxu0 0.0
    %661 = vmatprep.subr.mxu0 0.0
    %662 = vmatpush1.msra.mxu0 0.0
    %663 = vmatprep.subr.mxu0 0.0
    %664 = vmatpush1.msra.mxu0 0.0
    %665 = vmatprep.subr.mxu0 0.0
    %666 = vmatpush1.msra.mxu0 0.0
    %667 = vmatprep.subr.mxu0 0.0
    %668 = vmatpush1.msra.mxu0 0.0
    %669 = vmatprep.subr.mxu0 0.0
    %670 = vmatpush1.msra.mxu0 0.0
    %671 = vmatprep.subr.mxu0 0.0
    %672 = vmatpush1.msra.mxu0 0.0
    %673 = vmatprep.mubr.f32.mxu0 0.0
    %674 = vmatmul.mubr.f32.gmra.mrb[0].mxu0 %v607
    %v675 = vpop.f32.mrb[0].mxu0
    %v676 = vadd.f32 %v604, %v675
    %v677 = vpop.f32.mrb[0].mxu0
    %678 = vdwg.mxu0
    %v679 = vmax.f32 %v676, 0.0
    %v680 = vld [vmem:[%s7] sm:$0xff]
    %v681 = vld [vmem:[%s8] sm:$0x1]
    %v683 = vlaneseq
    %v684 = vshrl.u32 %v683, 7
    %v685 = vsub.s32 0, %v684
    %v686 = vrot.slane %v681, %v685
    %v689 = vsel %vm523, %v679, 0
    %691 = vmatprep.subr.mxu0 0.0
    %692 = vmatpush1.msra.mxu0 %v680
    %693 = vmatprep.subr.mxu0 0.0
    %694 = vmatpush1.msra.mxu0 0.0
    %695 = vmatprep.subr.mxu0 0.0
    %696 = vmatpush1.msra.mxu0 0.0
    %697 = vmatprep.subr.mxu0 0.0
    %698 = vmatpush1.msra.mxu0 0.0
    %699 = vmatprep.subr.mxu0 0.0
    %700 = vmatpush1.msra.mxu0 0.0
    %701 = vmatprep.subr.mxu0 0.0
    %702 = vmatpush1.msra.mxu0 0.0
    %703 = vmatprep.subr.mxu0 0.0
    %704 = vmatpush1.msra.mxu0 0.0
    %705 = vmatprep.subr.mxu0 0.0
    %706 = vmatpush1.msra.mxu0 0.0
    %707 = vmatprep.subr.mxu0 0.0
    %708 = vmatpush1.msra.mxu0 0.0
    %709 = vmatprep.subr.mxu0 0.0
    %710 = vmatpush1.msra.mxu0 0.0
    %711 = vmatprep.subr.mxu0 0.0
    %712 = vmatpush1.msra.mxu0 0.0
    %713 = vmatprep.subr.mxu0 0.0
    %714 = vmatpush1.msra.mxu0 0.0
    %715 = vmatprep.subr.mxu0 0.0
    %716 = vmatpush1.msra.mxu0 0.0
    %717 = vmatprep.subr.mxu0 0.0
    %718 = vmatpush1.msra.mxu0 0.0
    %719 = vmatprep.subr.mxu0 0.0
    %720 = vmatpush1.msra.mxu0 0.0
    %721 = vmatprep.subr.mxu0 0.0
    %722 = vmatpush1.msra.mxu0 0.0
    %723 = vmatprep.subr.mxu0 0.0
    %724 = vmatpush1.msra.mxu0 0.0
    %725 = vmatprep.subr.mxu0 0.0
    %726 = vmatpush1.msra.mxu0 0.0
    %727 = vmatprep.subr.mxu0 0.0
    %728 = vmatpush1.msra.mxu0 0.0
    %729 = vmatprep.subr.mxu0 0.0
    %730 = vmatpush1.msra.mxu0 0.0
    %731 = vmatprep.subr.mxu0 0.0
    %732 = vmatpush1.msra.mxu0 0.0
    %733 = vmatprep.subr.mxu0 0.0
    %734 = vmatpush1.msra.mxu0 0.0
    %735 = vmatprep.subr.mxu0 0.0
    %736 = vmatpush1.msra.mxu0 0.0
    %737 = vmatprep.subr.mxu0 0.0
    %738 = vmatpush1.msra.mxu0 0.0
    %739 = vmatprep.subr.mxu0 0.0
    %740 = vmatpush1.msra.mxu0 0.0
    %741 = vmatprep.subr.mxu0 0.0
    %742 = vmatpush1.msra.mxu0 0.0
    %743 = vmatprep.subr.mxu0 0.0
    %744 = vmatpush1.msra.mxu0 0.0
    %745 = vmatprep.subr.mxu0 0.0
    %746 = vmatpush1.msra.mxu0 0.0
    %747 = vmatprep.subr.mxu0 0.0
    %748 = vmatpush1.msra.mxu0 0.0
    %749 = vmatprep.subr.mxu0 0.0
    %750 = vmatpush1.msra.mxu0 0.0
    %751 = vmatprep.subr.mxu0 0.0
    %752 = vmatpush1.msra.mxu0 0.0
    %753 = vmatprep.subr.mxu0 0.0
    %754 = vmatpush1.msra.mxu0 0.0
    %755 = vmatprep.mubr.f32.mxu0 0.0
    %756 = vmatmul.mubr.f32.gmra.mrb[0].mxu0 %v689
    %v757 = vpop.f32.mrb[0].mxu0
    %v758 = vadd.f32 %v686, %v757
    %v759 = vpop.f32.mrb[0].mxu0
    %760 = vdwg.mxu0
    %vm761 = vcmask 80896
    %762 = vst.msk [vmem:[#allocation2] sm:$0xff] %vm761, %v758
    // Predicated region
    $region38: #{tpu_custom_call.1} parent=1 // pred_check
      _
    $region39: #{tpu_custom_call.1} parent=1 // pred_check_branch
      %764 = sbr.rel (0) target = $region41
    $region40: #{tpu_custom_call.1} parent=1 // pred_region
      %s766 = ssub.s32 128, 32
      %767 = vsyncadd [#allocation3], %s766
      %s768 = sshll.u32 [#allocation2], 4
      %s769 = int_to_ptr.vmem [resolvable:$true] %s768
      %774 = dma.vmem_to_hbm [thread:$0]  %s769, 32, %s9, [#allocation3], 32, 32, 2
    $region41: #{tpu_custom_call.1} parent=1 // pred_fallthru
      _
    // Predicated region
    $region42: #{tpu_custom_call.1} parent=1 // pred_check
      _
    $region43: #{tpu_custom_call.1} parent=1 // pred_check_branch
      %776 = sbr.rel (0) target = $region45
    $region44: #{tpu_custom_call.1} parent=1 // pred_region
      %777 = dma.done [#allocation3], 128
    $region45: #{tpu_custom_call.1} parent=1 // pred_fallthru
      _
    %778 = vsyncpa [#allocation3], 1

</llo_original>
